<compile_context>
chip_gen: v7x
topology: tpu7x:2x2x1
jax: 0.10.0
libtpu: 0.0.40
codegen_flags: <defaults>
</compile_context>

<pallas_src>
import functools

import jax
import jax.numpy as jnp
import numpy as np
from jax.experimental import pallas as pl
from jax.experimental.pallas import tpu as pltpu


def _round_up(x, m):
    return (x + m - 1) // m * m


def _custom_loss_kernel(
    yp_ref, yt_ref, sa_ref, co_ref, va_ref, out_ref, acc_ref,
    *, france_w, summer_w, winter_w, covid_w, vacances_w,
):
    s = pl.program_id(1)

    # (Re)initialize the resident VMEM accumulator at the start of each chunk.
    @pl.when(s == 0)
    def _():
        acc_ref[...] = jnp.zeros_like(acc_ref)

    # Upcast in-kernel (inputs may arrive as bf16); squared error plane (TN, D).
    diff = yp_ref[...].astype(jnp.float32) - yt_ref[...].astype(jnp.float32)
    mse = diff * diff

    # Row weights at (TN, 1) width only — one broadcast multiply below.
    sa = sa_ref[...]                                    # (TN, 1) int32
    ones = jnp.ones(sa.shape, jnp.float32)
    w = jnp.where(sa == 3, jnp.float32(summer_w), ones)
    w = jnp.where(sa == 1, jnp.float32(winter_w), w)
    w = w * jnp.where(co_ref[...] == 1, jnp.float32(covid_w), ones)
    w = w * jnp.where(va_ref[...] == 1, jnp.float32(vacances_w), ones)
    w = w * jnp.float32(france_w)

    wmse = mse * w                                      # (TN, D) f32

    # Sublane-group accumulate (pure per-lane VPU adds) into the (8, D) scratch.
    tn, d = wmse.shape
    acc_ref[...] += wmse.reshape(tn // 8, 8, d).sum(axis=0)

    # Last step of this chunk: dump the partial-sum tile (reduced in wrapper).
    @pl.when(s == pl.num_programs(1) - 1)
    def _():
        out_ref[...] = acc_ref[...][None]


def custom_loss(
    y_pred, y_true, saison, covid, vacances,
    france_weight, summer_weight, winter_weight, covid_weight, vacances_weight,
    *, tn=1024, vmem_limit_bytes=40 * 1024 * 1024,
):
    """Pallas TPU implementation of CustomLoss.forward. Returns a scalar f32."""
    N, D = y_pred.shape
    assert y_true.shape == (N, D)

    # Selectors as (N, 1) int32 columns (the PyTorch `.unsqueeze(1)`).
    sa = saison.reshape(N, 1).astype(jnp.int32)
    co = covid.reshape(N, 1).astype(jnp.int32)
    va = vacances.reshape(N, 1).astype(jnp.int32)

    # Row tile: multiple of 8, capped so the two double-buffered (tn, D) input
    # tiles stay within ~16 MiB of VMEM on every TPU generation.
    itemsize = jnp.dtype(y_pred.dtype).itemsize
    budget_rows = max(8, (((16 << 20) // (4 * max(D, 1) * itemsize)) // 8) * 8)
    tn_eff = min(_round_up(max(tn, 8), 8), budget_rows, _round_up(N, 8))

    # Pad rows: padded rows have y_pred == y_true == 0 so they contribute 0.
    n_pad = _round_up(N, tn_eff)
    if n_pad != N:
        pad = n_pad - N
        y_pred = jnp.pad(y_pred, ((0, pad), (0, 0)))
        y_true = jnp.pad(y_true, ((0, pad), (0, 0)))
        sa = jnp.pad(sa, ((0, pad), (0, 0)))
        co = jnp.pad(co, ((0, pad), (0, 0)))
        va = jnp.pad(va, ((0, pad), (0, 0)))

    n_blocks = n_pad // tn_eff
    # Split the reduction into two parallel chunks (feeds both v7x TensorCores;
    # runs serially and harmlessly on single-core v5e/v6e).
    p = 2 if (n_blocks >= 2 and n_blocks % 2 == 0) else 1
    s_steps = n_blocks // p

    kernel = functools.partial(
        _custom_loss_kernel,
        france_w=float(france_weight),
        summer_w=float(summer_weight),
        winter_w=float(winter_weight),
        covid_w=float(covid_weight),
        vacances_w=float(vacances_weight),
    )

    row_map = lambda pi, si: (pi * s_steps + si, 0)

    partials = pl.pallas_call(
        kernel,
        out_shape=jax.ShapeDtypeStruct((p, 8, D), jnp.float32),
        grid=(p, s_steps),
        in_specs=[
            pl.BlockSpec((tn_eff, D), row_map),   # y_pred tile (native dtype)
            pl.BlockSpec((tn_eff, D), row_map),   # y_true tile (native dtype)
            pl.BlockSpec((tn_eff, 1), row_map),   # saison
            pl.BlockSpec((tn_eff, 1), row_map),   # covid
            pl.BlockSpec((tn_eff, 1), row_map),   # vacances
        ],
        out_specs=pl.BlockSpec((1, 8, D), lambda pi, si: (pi, 0, 0)),
        scratch_shapes=[pltpu.VMEM((8, D), jnp.float32)],
        compiler_params=pltpu.CompilerParams(
            dimension_semantics=("parallel", "arbitrary"),
            vmem_limit_bytes=vmem_limit_bytes,
        ),
    )(y_pred, y_true, sa, co, va)

    # Single tiny final reduction + mean normalization (true N*D denominator).
    return jnp.sum(partials) * (1.0 / float(N * D))


def _reference_loss(y_pred, y_true, saison, covid, vacances,
                    france_w, summer_w, winter_w, covid_w, vacances_w):
    mse = (y_pred - y_true) ** 2
    ones = jnp.ones_like(mse)
    sa = saison[:, None]
    sw = jnp.where(sa == 3, summer_w, ones)
    sw = jnp.where(sa == 1, winter_w, sw)
    cw = jnp.where(covid[:, None] == 1, covid_w, ones)
    vw = jnp.where(vacances[:, None] == 1, vacances_w, ones)
    return jnp.mean(sw * cw * vw * france_w * mse)


if __name__ == "__main__":
    # Deterministic module "parameters" (constructor args of CustomLoss).
    france_weight = 2.0
    summer_weight = 1.5
    winter_weight = 1.25
    covid_weight = 3.0
    vacances_weight = 0.5

    key = jax.random.PRNGKey(0)

    def make_inputs(k, n, d):
        k1, k2, k3, k4, k5 = jax.random.split(k, 5)
        y_pred = jax.random.normal(k1, (n, d), dtype=jnp.float32)
        y_true = jax.random.normal(k2, (n, d), dtype=jnp.float32)
        saison = jax.random.randint(k3, (n,), 0, 4, dtype=jnp.int32)
        covid = jax.random.randint(k4, (n,), 0, 2, dtype=jnp.int32)
        vacances = jax.random.randint(k5, (n,), 0, 2, dtype=jnp.int32)
        return y_pred, y_true, saison, covid, vacances

    # Cases: module-sized shape; padded + multi-step path; two-parallel-chunk path.
    for n, d, tn in [(16, 32, 1024), (300, 32, 64), (256, 32, 64)]:
        key, sub = jax.random.split(key)
        args = make_inputs(sub, n, d)
        loss = custom_loss(
            *args, france_weight, summer_weight, winter_weight,
            covid_weight, vacances_weight, tn=tn,
        )
        loss = jax.block_until_ready(loss)
        ref = _reference_loss(
            *args, france_weight, summer_weight, winter_weight,
            covid_weight, vacances_weight,
        )
        np.testing.assert_allclose(np.asarray(loss), np.asarray(ref),
                                   rtol=1e-5, atol=1e-6)

    print("KERNEL_OK")
</pallas_src>

<mosaic_0001>
module attributes {stable_mosaic.version = 11 : i64} {
  func.func @_custom_loss_kernel(%arg0: i32, %arg1: i32, %arg2: memref<16x32xf32, #tpu.memory_space<vmem>>, %arg3: memref<16x32xf32, #tpu.memory_space<vmem>>, %arg4: memref<16x1xi32, #tpu.memory_space<vmem>>, %arg5: memref<16x1xi32, #tpu.memory_space<vmem>>, %arg6: memref<16x1xi32, #tpu.memory_space<vmem>>, %arg7: memref<1x8x32xf32, #tpu.memory_space<vmem>>, %arg8: memref<8x32xf32, #tpu.memory_space<vmem>>) attributes {dimension_semantics = [#tpu.dimension_semantics<parallel>, #tpu.dimension_semantics<arbitrary>], iteration_bounds = array<i64: 1, 1>, scalar_prefetch = 0 : i64, scratch_operands = 1 : i64, tpu.core_type = #tpu.core_type<tc>, window_params = [{transform_indices = @transform_0, window_bounds = array<i64: 16, 32>}, {transform_indices = @transform_1, window_bounds = array<i64: 16, 32>}, {transform_indices = @transform_2, window_bounds = array<i64: 16, 1>}, {transform_indices = @transform_3, window_bounds = array<i64: 16, 1>}, {transform_indices = @transform_4, window_bounds = array<i64: 16, 1>}, {transform_indices = @transform_5, window_bounds = array<i64: 1, 8, 32>}]} {
    %c0_i32 = arith.constant 0 : i32
    %0 = arith.cmpi eq, %arg1, %c0_i32 : i32
    %1 = arith.extui %0 : i1 to i32
    %c0_i32_0 = arith.constant 0 : i32
    %2 = arith.cmpi ne, %1, %c0_i32_0 : i32
    scf.if %2 {
      %cst_24 = arith.constant 0.000000e+00 : f32
      %41 = vector.broadcast %cst_24 : f32 to vector<8x32xf32>
      %c0_25 = arith.constant 0 : index
      %c0_26 = arith.constant 0 : index
      %42 = vector.load %arg8[%c0_25, %c0_26] : memref<8x32xf32, #tpu.memory_space<vmem>>, vector<8x32xf32>
      tpu.vector_store %arg8[%c0_25, %c0_26], %41 {strides = array<i32>} : memref<8x32xf32, #tpu.memory_space<vmem>>, vector<8x32xf32>,
    } else {
    }
    %c0 = arith.constant 0 : index
    %c0_1 = arith.constant 0 : index
    %3 = vector.load %arg2[%c0, %c0_1] : memref<16x32xf32, #tpu.memory_space<vmem>>, vector<16x32xf32>
    %c0_2 = arith.constant 0 : index
    %c0_3 = arith.constant 0 : index
    %4 = vector.load %arg3[%c0_2, %c0_3] : memref<16x32xf32, #tpu.memory_space<vmem>>, vector<16x32xf32>
    %5 = arith.subf %3, %4 : vector<16x32xf32>
    %6 = arith.mulf %5, %5 : vector<16x32xf32>
    %c0_4 = arith.constant 0 : index
    %c0_5 = arith.constant 0 : index
    %7 = vector.load %arg4[%c0_4, %c0_5] : memref<16x1xi32, #tpu.memory_space<vmem>>, vector<16x1xi32>
    %cst = arith.constant 1.000000e+00 : f32
    %8 = vector.broadcast %cst : f32 to vector<16x1xf32>
    %c3_i32 = arith.constant 3 : i32
    %9 = vector.broadcast %c3_i32 : i32 to vector<16x1xi32>
    %10 = arith.cmpi eq, %7, %9 : vector<16x1xi32>
    %cst_6 = arith.constant 1.500000e+00 : f32
    %11 = vector.broadcast %cst_6 : f32 to vector<16x1xf32>
    %12 = arith.select %10, %11, %8 : vector<16x1xi1>, vector<16x1xf32>
    %c1_i32 = arith.constant 1 : i32
    %13 = vector.broadcast %c1_i32 : i32 to vector<16x1xi32>
    %14 = arith.cmpi eq, %7, %13 : vector<16x1xi32>
    %cst_7 = arith.constant 1.250000e+00 : f32
    %15 = vector.broadcast %cst_7 : f32 to vector<16x1xf32>
    %16 = arith.select %14, %15, %12 : vector<16x1xi1>, vector<16x1xf32>
    %c0_8 = arith.constant 0 : index
    %c0_9 = arith.constant 0 : index
    %17 = vector.load %arg5[%c0_8, %c0_9] : memref<16x1xi32, #tpu.memory_space<vmem>>, vector<16x1xi32>
    %c1_i32_10 = arith.constant 1 : i32
    %18 = vector.broadcast %c1_i32_10 : i32 to vector<16x1xi32>
    %19 = arith.cmpi eq, %17, %18 : vector<16x1xi32>
    %cst_11 = arith.constant 3.000000e+00 : f32
    %20 = vector.broadcast %cst_11 : f32 to vector<16x1xf32>
    %21 = arith.select %19, %20, %8 : vector<16x1xi1>, vector<16x1xf32>
    %22 = arith.mulf %16, %21 : vector<16x1xf32>
    %c0_12 = arith.constant 0 : index
    %c0_13 = arith.constant 0 : index
    %23 = vector.load %arg6[%c0_12, %c0_13] : memref<16x1xi32, #tpu.memory_space<vmem>>, vector<16x1xi32>
    %c1_i32_14 = arith.constant 1 : i32
    %24 = vector.broadcast %c1_i32_14 : i32 to vector<16x1xi32>
    %25 = arith.cmpi eq, %23, %24 : vector<16x1xi32>
    %cst_15 = arith.constant 5.000000e-01 : f32
    %26 = vector.broadcast %cst_15 : f32 to vector<16x1xf32>
    %27 = arith.select %25, %26, %8 : vector<16x1xi1>, vector<16x1xf32>
    %28 = arith.mulf %22, %27 : vector<16x1xf32>
    %cst_16 = arith.constant 2.000000e+00 : f32
    %29 = vector.broadcast %cst_16 : f32 to vector<16x1xf32>
    %30 = arith.mulf %28, %29 : vector<16x1xf32>
    %31 = vector.broadcast %30 : vector<16x1xf32> to vector<16x32xf32>
    %32 = arith.mulf %6, %31 : vector<16x32xf32>
    %c0_17 = arith.constant 0 : index
    %c0_18 = arith.constant 0 : index
    %33 = vector.load %arg8[%c0_17, %c0_18] : memref<8x32xf32, #tpu.memory_space<vmem>>, vector<8x32xf32>
    %34 = vector.shape_cast %32 : vector<16x32xf32> to vector<2x8x32xf32>
    %cst_19 = arith.constant dense<0.000000e+00> : vector<8x32xf32>
    %35 = vector.multi_reduction <add>, %34, %cst_19 [0] : vector<2x8x32xf32> to vector<8x32xf32>
    %36 = arith.addf %33, %35 : vector<8x32xf32>
    %c0_20 = arith.constant 0 : index
    %c0_21 = arith.constant 0 : index
    %37 = vector.load %arg8[%c0_20, %c0_21] : memref<8x32xf32, #tpu.memory_space<vmem>>, vector<8x32xf32>
    tpu.vector_store %arg8[%c0_20, %c0_21], %36 {strides = array<i32>} : memref<8x32xf32, #tpu.memory_space<vmem>>, vector<8x32xf32>,
    %c0_i32_22 = arith.constant 0 : i32
    %38 = arith.cmpi eq, %arg1, %c0_i32_22 : i32
    %39 = arith.extui %38 : i1 to i32
    %c0_i32_23 = arith.constant 0 : i32
    %40 = arith.cmpi ne, %39, %c0_i32_23 : i32
    scf.if %40 {
      %c0_24 = arith.constant 0 : index
      %c0_25 = arith.constant 0 : index
      %41 = vector.load %arg8[%c0_24, %c0_25] : memref<8x32xf32, #tpu.memory_space<vmem>>, vector<8x32xf32>
      %42 = vector.shape_cast %41 : vector<8x32xf32> to vector<1x8x32xf32>
      %c0_26 = arith.constant 0 : index
      %c0_27 = arith.constant 0 : index
      %c0_28 = arith.constant 0 : index
      %43 = vector.load %arg7[%c0_26, %c0_27, %c0_28] : memref<1x8x32xf32, #tpu.memory_space<vmem>>, vector<1x8x32xf32>
      tpu.vector_store %arg7[%c0_26, %c0_27, %c0_28], %42 {strides = array<i32>} : memref<1x8x32xf32, #tpu.memory_space<vmem>>, vector<1x8x32xf32>,
    } else {
    }
    return
  }
  func.func @transform_0(%arg0: i32, %arg1: i32) -> (i32, i32) {
    %c1_i32 = arith.constant 1 : i32
    %0 = arith.muli %arg0, %c1_i32 : i32
    %1 = arith.addi %0, %arg1 : i32
    %c0_i32 = arith.constant 0 : i32
    %c0_i32_0 = arith.constant 0 : i32
    return %1, %c0_i32 : i32, i32
  }
  func.func @transform_1(%arg0: i32, %arg1: i32) -> (i32, i32) {
    %c1_i32 = arith.constant 1 : i32
    %0 = arith.muli %arg0, %c1_i32 : i32
    %1 = arith.addi %0, %arg1 : i32
    %c0_i32 = arith.constant 0 : i32
    %c0_i32_0 = arith.constant 0 : i32
    return %1, %c0_i32 : i32, i32
  }
  func.func @transform_2(%arg0: i32, %arg1: i32) -> (i32, i32) {
    %c1_i32 = arith.constant 1 : i32
    %0 = arith.muli %arg0, %c1_i32 : i32
    %1 = arith.addi %0, %arg1 : i32
    %c0_i32 = arith.constant 0 : i32
    %c0_i32_0 = arith.constant 0 : i32
    return %1, %c0_i32 : i32, i32
  }
  func.func @transform_3(%arg0: i32, %arg1: i32) -> (i32, i32) {
    %c1_i32 = arith.constant 1 : i32
    %0 = arith.muli %arg0, %c1_i32 : i32
    %1 = arith.addi %0, %arg1 : i32
    %c0_i32 = arith.constant 0 : i32
    %c0_i32_0 = arith.constant 0 : i32
    return %1, %c0_i32 : i32, i32
  }
  func.func @transform_4(%arg0: i32, %arg1: i32) -> (i32, i32) {
    %c1_i32 = arith.constant 1 : i32
    %0 = arith.muli %arg0, %c1_i32 : i32
    %1 = arith.addi %0, %arg1 : i32
    %c0_i32 = arith.constant 0 : i32
    %c0_i32_0 = arith.constant 0 : i32
    return %1, %c0_i32 : i32, i32
  }
  func.func @transform_5(%arg0: i32, %arg1: i32) -> (i32, i32, i32) {
    %c0_i32 = arith.constant 0 : i32
    %c0_i32_0 = arith.constant 0 : i32
    %c0_i32_1 = arith.constant 0 : i32
    return %arg0, %c0_i32, %c0_i32_0 : i32, i32, i32
  }
}

</mosaic_0001>

<llo_original>
// kernel: tpu_custom_call.1
$region0: #{tpu_custom_call.1}
  #allocation0 [shape = 'u32[]', space=smem, size = 0x4, offset = 0x4, fixed_abs, tag = 'smem constant byte address 0x4 - core index']
  #allocation1 [shape = 'u32[144,128]{1,0:T(1,128)}', space=vmem, size = 0x12000, scoped, tag = 'internal scratch']
  #allocation2 [shape = 'f32[8,32]{1,0:T(8,128)}', space=vmem, size = 0x1000, scoped, tag = 'scratch operand']
  %s0 = inlined_call_operand.vmem [shape: f32[16,32], index: 0, kind: input, shape index: {}]
  %s1 = inlined_call_operand.vmem [shape: f32[16,32], index: 1, kind: input, shape index: {}]
  %s2 = inlined_call_operand.vmem [shape: s32[16,1], index: 2, kind: input, shape index: {}]
  %s3 = inlined_call_operand.vmem [shape: s32[16,1], index: 3, kind: input, shape index: {}]
  %s4 = inlined_call_operand.vmem [shape: s32[16,1], index: 4, kind: input, shape index: {}]
  %s5 = inlined_call_operand.hbm [shape: f32[1,8,32], index: 5, kind: output, shape index: {}]
  %s6 = sld [smem:[#allocation0]]
  $region38: #{tpu_custom_call.1} parent=0
    _
  %s8 = ssub.s32 1, %s6
  %s9 = scalar_select 0, %s8, %s6
  $region1: #{tpu_custom_call.1} parent=0
    #allocation3 [shape = 'u8[4096]{0}', space=vmem, size = 0x1000, scoped, tag = 'output window, operand 0, single buffered']
    #allocation4 [shape = 's32[1]{0}', space=sflag, size = 0x4, scoped, tag = 'scoped memory for tpu_custom_call.1']
    %10 = vsyncpa [#allocation4], 0
    // Predicated region
    $region2: #{tpu_custom_call.1} parent=1 // pred_check
      _
    $region3: #{tpu_custom_call.1} parent=1 // pred_check_branch
      %12 = sbr.rel (0) target = $region5
    $region4: #{tpu_custom_call.1} parent=1 // pred_region
      %s13 = sadd.s32 0, 0
      %s14 = smul.u32 2, %s13
      %p15 = scmp.lt.s32.totalorder %s14, 1
      %s16 = scalar_select %p15, %s14, 1
      %s17 = smul.addr %s16, 8
      %s18 = scalar_lea.vmem %s0, %s17
      %s19 = sadd.s32 0, 0
      %s20 = smul.u32 2, %s19
    $region5: #{tpu_custom_call.1} parent=1 // pred_fallthru
      _
    // Predicated region
    $region6: #{tpu_custom_call.1} parent=1 // pred_check
      _
    $region7: #{tpu_custom_call.1} parent=1 // pred_check_branch
      %22 = sbr.rel (0) target = $region9
    $region8: #{tpu_custom_call.1} parent=1 // pred_region
      %s23 = sadd.s32 0, 0
      %s24 = smul.u32 2, %s23
      %p25 = scmp.lt.s32.totalorder %s24, 1
      %s26 = scalar_select %p25, %s24, 1
      %s27 = smul.addr %s26, 8
      %s28 = scalar_lea.vmem %s1, %s27
      %s29 = sadd.s32 0, 0
      %s30 = smul.u32 2, %s29
    $region9: #{tpu_custom_call.1} parent=1 // pred_fallthru
      _
    // Predicated region
    $region10: #{tpu_custom_call.1} parent=1 // pred_check
      _
    $region11: #{tpu_custom_call.1} parent=1 // pred_check_branch
      %32 = sbr.rel (0) target = $region13
    $region12: #{tpu_custom_call.1} parent=1 // pred_region
      %s33 = sadd.s32 0, 0
      %s34 = smul.u32 2, %s33
      %p35 = scmp.lt.s32.totalorder %s34, 1
      %s36 = scalar_select %p35, %s34, 1
      %s37 = smul.addr %s36, 8
      %s38 = scalar_lea.vmem %s2, %s37
      %s39 = sadd.s32 0, 0
      %s40 = smul.u32 2, %s39
    $region13: #{tpu_custom_call.1} parent=1 // pred_fallthru
      _
    // Predicated region
    $region14: #{tpu_custom_call.1} parent=1 // pred_check
      _
    $region15: #{tpu_custom_call.1} parent=1 // pred_check_branch
      %42 = sbr.rel (0) target = $region17
    $region16: #{tpu_custom_call.1} parent=1 // pred_region
      %s43 = sadd.s32 0, 0
      %s44 = smul.u32 2, %s43
      %p45 = scmp.lt.s32.totalorder %s44, 1
      %s46 = scalar_select %p45, %s44, 1
      %s47 = smul.addr %s46, 8
      %s48 = scalar_lea.vmem %s3, %s47
      %s49 = sadd.s32 0, 0
      %s50 = smul.u32 2, %s49
    $region17: #{tpu_custom_call.1} parent=1 // pred_fallthru
      _
    // Predicated region
    $region18: #{tpu_custom_call.1} parent=1 // pred_check
      _
    $region19: #{tpu_custom_call.1} parent=1 // pred_check_branch
      %52 = sbr.rel (0) target = $region21
    $region20: #{tpu_custom_call.1} parent=1 // pred_region
      %s53 = sadd.s32 0, 0
      %s54 = smul.u32 2, %s53
      %p55 = scmp.lt.s32.totalorder %s54, 1
      %s56 = scalar_select %p55, %s54, 1
      %s57 = smul.addr %s56, 8
      %s58 = scalar_lea.vmem %s4, %s57
      %s59 = sadd.s32 0, 0
      %s60 = smul.u32 2, %s59
    $region21: #{tpu_custom_call.1} parent=1 // pred_fallthru
      _
    %s61 = sadd.s32 0, 0
    %s62 = smul.u32 2, %s61
    %p63 = scmp.lt.s32.totalorder %s62, 1
    %s64 = scalar_select %p63, %s62, 1
    %s65 = smul.addr %s64, 8
    %s66 = scalar_lea.vmem %s0, %s65
    %s67 = sadd.s32 0, 0
    %s68 = smul.u32 2, %s67
    %p69 = scmp.lt.s32.totalorder %s68, 1
    %s70 = scalar_select %p69, %s68, 1
    %s71 = smul.addr %s70, 8
    %s72 = scalar_lea.vmem %s1, %s71
    %s73 = sadd.s32 0, 0
    %s74 = smul.u32 2, %s73
    %p75 = scmp.lt.s32.totalorder %s74, 1
    %s76 = scalar_select %p75, %s74, 1
    %s77 = smul.addr %s76, 8
    %s78 = scalar_lea.vmem %s2, %s77
    %s79 = sadd.s32 0, 0
    %s80 = smul.u32 2, %s79
    %p81 = scmp.lt.s32.totalorder %s80, 1
    %s82 = scalar_select %p81, %s80, 1
    %s83 = smul.addr %s82, 8
    %s84 = scalar_lea.vmem %s3, %s83
    %s85 = sadd.s32 0, 0
    %s86 = smul.u32 2, %s85
    %p87 = scmp.lt.s32.totalorder %s86, 1
    %s88 = scalar_select %p87, %s86, 1
    %s89 = smul.addr %s88, 8
    %s90 = scalar_lea.vmem %s4, %s89
    %s91 = sadd.s32 0, 0
    %s92 = smul.u32 2, %s91
    %p93 = scmp.lt.s32.totalorder %s92, 1
    %s94 = scalar_select %p93, %s92, 1
    %s95 = smul.addr %s94, 8
    %s96 = scalar_lea.vmem %s0, %s95
    %s97 = sadd.s32 0, 0
    %s98 = smul.u32 2, %s97
    %s99 = sadd.s32 0, 0
    %s100 = smul.u32 2, %s99
    %p101 = scmp.lt.s32.totalorder %s100, 1
    %s102 = scalar_select %p101, %s100, 1
    %s103 = smul.addr %s102, 8
    %s104 = scalar_lea.vmem %s1, %s103
    %s105 = sadd.s32 0, 0
    %s106 = smul.u32 2, %s105
    %s107 = sadd.s32 0, 0
    %s108 = smul.u32 2, %s107
    %p109 = scmp.lt.s32.totalorder %s108, 1
    %s110 = scalar_select %p109, %s108, 1
    %s111 = smul.addr %s110, 8
    %s112 = scalar_lea.vmem %s2, %s111
    %s113 = sadd.s32 0, 0
    %s114 = smul.u32 2, %s113
    %s115 = sadd.s32 0, 0
    %s116 = smul.u32 2, %s115
    %p117 = scmp.lt.s32.totalorder %s116, 1
    %s118 = scalar_select %p117, %s116, 1
    %s119 = smul.addr %s118, 8
    %s120 = scalar_lea.vmem %s3, %s119
    %s121 = sadd.s32 0, 0
    %s122 = smul.u32 2, %s121
    %s123 = sadd.s32 0, 0
    %s124 = smul.u32 2, %s123
    %p125 = scmp.lt.s32.totalorder %s124, 1
    %s126 = scalar_select %p125, %s124, 1
    %s127 = smul.addr %s126, 8
    %s128 = scalar_lea.vmem %s4, %s127
    %s129 = sadd.s32 0, 0
    %s130 = smul.u32 2, %s129
    %p131 = scmp.eq.s32.totalorder 0, 0
    // Predicated region
    $region22: #{tpu_custom_call.1} parent=1 // pred_check
      %p132 = pneg %p131
    $region23: #{tpu_custom_call.1} parent=1 // pred_check_branch
      %134 = sbr.rel (%p132) target = $region25
    $region24: #{tpu_custom_call.1} parent=1 // pred_region
      %vm135 = vcmask 261120
      %136 = vst.msk [vmem:[#allocation2] sm:$0xff] %vm135, 0.0
    $region25: #{tpu_custom_call.1} parent=1 // pred_fallthru
      _
    %v137 = vld [vmem:[%s96] sm:$0xff]
    %v138 = vld [vmem:[%s96 + $0x8] sm:$0xff]
    %v139 = vld [vmem:[%s104] sm:$0xff]
    %v140 = vld [vmem:[%s104 + $0x8] sm:$0xff]
    %v141 = vsub.f32 %v137, %v139
    %v142 = vsub.f32 %v138, %v140
    %v143 = vmul.f32 %v141, %v141
    %v144 = vmul.f32 %v142, %v142
    %v145 = vld [vmem:[%s112] sm:$0xff]
    %v146 = vld [vmem:[%s112 + $0x8] sm:$0xff]
    %vm147 = vcmp.eq.s32.totalorder %v145, 3
    %vm148 = vcmp.eq.s32.totalorder %v146, 3
    %v149 = vsel %vm147, 1.5, 1.0
    %v150 = vsel %vm148, 1.5, 1.0
    %vm151 = vcmp.eq.s32.totalorder %v145, 1
    %vm152 = vcmp.eq.s32.totalorder %v146, 1
    %v153 = vsel %vm151, 1.25, %v149
    %v154 = vsel %vm152, 1.25, %v150
    %v155 = vld [vmem:[%s120] sm:$0xff]
    %v156 = vld [vmem:[%s120 + $0x8] sm:$0xff]
    %vm157 = vcmp.eq.s32.totalorder %v155, 1
    %vm158 = vcmp.eq.s32.totalorder %v156, 1
    %v159 = vsel %vm157, 3.0, 1.0
    %v160 = vsel %vm158, 3.0, 1.0
    %v161 = vmul.f32 %v153, %v159
    %v162 = vmul.f32 %v154, %v160
    %v163 = vld [vmem:[%s128] sm:$0xff]
    %v164 = vld [vmem:[%s128 + $0x8] sm:$0xff]
    %vm165 = vcmp.eq.s32.totalorder %v163, 1
    %vm166 = vcmp.eq.s32.totalorder %v164, 1
    %v167 = vsel %vm165, 0.5, 1.0
    %v168 = vsel %vm166, 0.5, 1.0
    %v169 = vmul.f32 %v161, %v167
    %v170 = vmul.f32 %v162, %v168
    %v171 = vmul.f32 %v169, 2.0
    %v172 = vmul.f32 %v170, 2.0
    %174 = vset.pattern.permute.xlu0 0
    %175 = vperm.xlu0 %174, %v171
    %v176 = vpop.permute.xlu0 %175
    %179 = vset.pattern.permute.xlu0 0
    %180 = vperm.xlu0 %179, %v172
    %v181 = vpop.permute.xlu0 %180
    %v183 = vmul.f32 %v143, %v176
    %v184 = vmul.f32 %v144, %v181
    %v185 = vld [vmem:[#allocation2] sm:$0xff]
    %vm186 = vcmask 261120
    %v187 = vsel %vm186, %v183, 0.0
    %v188 = vsel %vm186, %v184, 0.0
    %v189 = vadd.f32 %v187, %v188
    %v190 = vadd.f32 %v185, %v189
    %191 = vst.msk [vmem:[#allocation2] sm:$0xff] %vm186, %v190
    // Predicated region
    $region26: #{tpu_custom_call.1} parent=1 // pred_check
      %p192 = pneg %p131
    $region27: #{tpu_custom_call.1} parent=1 // pred_check_branch
      %194 = sbr.rel (%p192) target = $region29
    $region28: #{tpu_custom_call.1} parent=1 // pred_region
      %v195 = vld [vmem:[#allocation2] sm:$0xff]
      %196 = vst.msk [vmem:[#allocation3] sm:$0xff] %vm186, %v195
    $region29: #{tpu_custom_call.1} parent=1 // pred_fallthru
      _
    // Predicated region
    $region30: #{tpu_custom_call.1} parent=1 // pred_check
      _
    $region31: #{tpu_custom_call.1} parent=1 // pred_check_branch
      %198 = sbr.rel (0) target = $region33
    $region32: #{tpu_custom_call.1} parent=1 // pred_region
      %s200 = ssub.s32 128, 128
      %201 = vsyncadd [#allocation4], %s200
      %s203 = sshll.u32 [#allocation3], 4
      %s204 = int_to_ptr.vmem [resolvable:$true] %s203
      %206 = dma.vmem_to_hbm [thread:$0]  %s204, 128, %s5, [#allocation4]
    $region33: #{tpu_custom_call.1} parent=1 // pred_fallthru
      _
    // Predicated region
    $region34: #{tpu_custom_call.1} parent=1 // pred_check
      _
    $region35: #{tpu_custom_call.1} parent=1 // pred_check_branch
      %208 = sbr.rel (0) target = $region37
    $region36: #{tpu_custom_call.1} parent=1 // pred_region
      %209 = dma.done [#allocation4], 128
    $region37: #{tpu_custom_call.1} parent=1 // pred_fallthru
      _
    %210 = vsyncpa [#allocation4], 1

</llo_original>
